<compile_context>
chip_gen: v6e
topology: v6e:2x2x1
jax: 0.10.0
libtpu: 0.0.40
codegen_flags: <defaults>
</compile_context>

<pallas_src>
import functools
import math

import jax
import jax.numpy as jnp
from jax import lax
from jax.experimental import pallas as pl
from jax.experimental.pallas import tpu as pltpu


def _round_up(x, n):
    return ((x + n - 1) // n) * n


def _pick_tile(m, prefs):
    # TODO(synk): for large ragged m, pad m to a multiple of 128 and mask the
    # padded logits to -inf instead of falling back to one full-extent tile.
    for t in prefs:
        if m % t == 0:
            return t
    return m


# ----------------------------- kernel 1: gating -----------------------------
def _gate_kernel(k_ref, q_ref, wk_ref, bk_ref, wq_ref, bq_ref, wkq_ref, bkq_ref,
                 k2_ref, q2_ref, *, inv_sqrt_d):
    k = k_ref[...]
    q = q_ref[...]
    k1 = jnp.dot(k, wk_ref[...], preferred_element_type=jnp.float32) + bk_ref[...]
    q1 = jnp.dot(q, wq_ref[...], preferred_element_type=jnp.float32) + bq_ref[...]
    kq_pre = (jnp.dot(k1 * q1, wkq_ref[...], preferred_element_type=jnp.float32)
              + bkq_ref[...])
    # Numerically stable sigmoid on the EUP: sigmoid(x) = 0.5*(tanh(x/2)+1).
    kq = 0.5 * (jnp.tanh(0.5 * kq_pre) + 1.0)
    # Fold 1/sqrt(d) into k2 so the (m, m) similarity never needs a scale.
    k2_ref[...] = k * kq * inv_sqrt_d
    q2_ref[...] = q * kq


# ---------------- kernel 2: reduce pass (per-row-tile partials) --------------
def _reduce_kernel(k2_ref, q2_ref, mx_ref, ls_ref, m_sc, l_sc, *,
                   tile_m, q2_resident):
    j = pl.program_id(1)

    @pl.when(j == 0)
    def _():
        m_sc[...] = jnp.full_like(m_sc, -jnp.inf)
        l_sc[...] = jnp.zeros_like(l_sc)

    if q2_resident:
        off = pl.multiple_of(j * tile_m, tile_m)
        q2 = q2_ref[pl.ds(off, tile_m), :]
    else:
        q2 = q2_ref[...]

    # s_tile = k2_i @ q2_j^T : contract both feature dims on the MXU,
    # no materialized transpose of q2.
    s = lax.dot_general(k2_ref[...], q2,
                        dimension_numbers=(((1,), (1,)), ((), ())),
                        preferred_element_type=jnp.float32)

    # Per-column (per-lane) online max / sum partials: no cross-lane XLU
    # reduction and no (1,1) scalar read-modify-write on the critical path.
    col_max = jnp.max(s, axis=0, keepdims=True)                # (1, tile_m)
    m_new = jnp.maximum(m_sc[...], col_max)
    l_sc[...] = (l_sc[...] * jnp.exp(m_sc[...] - m_new)
                 + jnp.sum(jnp.exp(s - m_new), axis=0, keepdims=True))
    m_sc[...] = m_new

    @pl.when(j == pl.num_programs(1) - 1)
    def _():
        mx_ref[0] = m_sc[...]
        ls_ref[0] = l_sc[...]


# ------------------- kernel 3: normalize pass (write tiles) ------------------
def _normalize_kernel(stats_ref, k2_ref, q2_ref, o_ref, *, tile_m, q2_resident):
    if q2_resident:
        off = pl.multiple_of(pl.program_id(1) * tile_m, tile_m)
        q2 = q2_ref[pl.ds(off, tile_m), :]
    else:
        q2 = q2_ref[...]
    s = lax.dot_general(k2_ref[...], q2,
                        dimension_numbers=(((1,), (1,)), ((), ())),
                        preferred_element_type=jnp.float32)
    # stats_ref[0] = global max, stats_ref[1] = 1 / global sum (SMEM scalars).
    o_ref[...] = (jnp.exp(s - stats_ref[0]) * stats_ref[1]).astype(o_ref.dtype)


# --------------------------------- wrapper -----------------------------------
def prepare_gsa_params(params, d, d_pad):
    """Hoisted once per model: transpose torch Linear weights to (d_in, d_out)
    and zero-pad to (d_pad, d_pad); biases to (1, d_pad) with zero padding."""
    def pad_w(w):
        w_t = jnp.asarray(w, jnp.float32).T
        return jnp.zeros((d_pad, d_pad), jnp.float32).at[:d, :d].set(w_t)

    def pad_b(b):
        return jnp.zeros((1, d_pad), jnp.float32).at[0, :d].set(
            jnp.asarray(b, jnp.float32))

    return {
        "wk": pad_w(params["wk"]), "bk": pad_b(params["bk"]),
        "wq": pad_w(params["wq"]), "bq": pad_b(params["bq"]),
        "wkq": pad_w(params["wkq"]), "bkq": pad_b(params["bkq"]),
    }


@functools.partial(jax.jit, static_argnames=("d",))
def _gsa_forward(k, q, prep, *, d):
    m = k.shape[0]
    d_pad = prep["wk"].shape[0]

    if d_pad != d:  # lane-dense feature dim (multiple of 128)
        pad = [(0, 0), (0, d_pad - d)]
        k = jnp.pad(k, pad)
        q = jnp.pad(q, pad)

    # --- call 1: gating (large independent row tiles -> megacore parallel) ---
    gate_tile = _pick_tile(m, (2048, 1024, 512, 256, 128))
    n_gate = m // gate_tile
    row_spec = pl.BlockSpec((gate_tile, d_pad), lambda i: (i, 0))
    w_spec = pl.BlockSpec((d_pad, d_pad), lambda i: (0, 0))
    b_spec = pl.BlockSpec((1, d_pad), lambda i: (0, 0))

    k2, q2 = pl.pallas_call(
        functools.partial(_gate_kernel, inv_sqrt_d=1.0 / math.sqrt(d)),
        grid=(n_gate,),
        in_specs=[row_spec, row_spec,
                  w_spec, b_spec, w_spec, b_spec, w_spec, b_spec],
        out_specs=[row_spec, row_spec],
        out_shape=[jax.ShapeDtypeStruct((m, d_pad), jnp.float32)] * 2,
        compiler_params=pltpu.CompilerParams(
            dimension_semantics=("parallel",),
            vmem_limit_bytes=32 * 1024 * 1024),
    )(k, q, prep["wk"], prep["bk"], prep["wq"], prep["bq"],
      prep["wkq"], prep["bkq"])

    # --- shared tiling for the similarity (reduce + normalize) calls --------
    # tile_m capped at 1024: output double-buffer 8 MiB, safe on v7x's 64 MiB
    # VMEM; v6e/v5e could go to 2048 with a ~64 MiB limit.
    tile_m = _pick_tile(m, (1024, 512, 256, 128))
    n_t = m // tile_m
    # Keep q2 fully VMEM-resident (single DMA, sliced per j-step) when small.
    q2_resident = (m * d_pad * 4) <= (8 << 20)
    if q2_resident:
        q2_spec_r = pl.BlockSpec((m, d_pad), lambda i, j: (0, 0))
        q2_spec_n = pl.BlockSpec((m, d_pad), lambda i, j, s: (0, 0))
    else:
        q2_spec_r = pl.BlockSpec((tile_m, d_pad), lambda i, j: (j, 0))
        q2_spec_n = pl.BlockSpec((tile_m, d_pad), lambda i, j, s: (j, 0))

    # --- call 2: reduce pass -> per-row-tile per-column (max, sum) partials --
    mx, ls = pl.pallas_call(
        functools.partial(_reduce_kernel, tile_m=tile_m, q2_resident=q2_resident),
        grid=(n_t, n_t),
        in_specs=[pl.BlockSpec((tile_m, d_pad), lambda i, j: (i, 0)), q2_spec_r],
        out_specs=[pl.BlockSpec((1, 1, tile_m), lambda i, j: (i, 0, 0)),
                   pl.BlockSpec((1, 1, tile_m), lambda i, j: (i, 0, 0))],
        out_shape=[jax.ShapeDtypeStruct((n_t, 1, tile_m), jnp.float32)] * 2,
        scratch_shapes=[pltpu.VMEM((1, tile_m), jnp.float32),   # running max
                        pltpu.VMEM((1, tile_m), jnp.float32)],  # running sum
        compiler_params=pltpu.CompilerParams(
            dimension_semantics=("parallel", "arbitrary"),
            vmem_limit_bytes=48 * 1024 * 1024),
    )(k2, q2)

    # Tiny logsumexp-style combine of the partials in plain JAX.
    m_glob = jnp.max(mx)
    l_glob = jnp.sum(ls * jnp.exp(mx - m_glob))
    stats = jnp.stack([m_glob, 1.0 / l_glob]).astype(jnp.float32)

    # --- call 3: normalize pass; both axes parallel, scalars via prefetch ----
    out = pl.pallas_call(
        functools.partial(_normalize_kernel, tile_m=tile_m,
                          q2_resident=q2_resident),
        grid_spec=pltpu.PrefetchScalarGridSpec(
            num_scalar_prefetch=1,
            grid=(n_t, n_t),
            in_specs=[pl.BlockSpec((tile_m, d_pad), lambda i, j, s: (i, 0)),
                      q2_spec_n],
            out_specs=pl.BlockSpec((tile_m, tile_m), lambda i, j, s: (i, j))),
        out_shape=jax.ShapeDtypeStruct((m, m), jnp.float32),
        compiler_params=pltpu.CompilerParams(
            dimension_semantics=("parallel", "parallel"),
            vmem_limit_bytes=48 * 1024 * 1024),
    )(stats, k2, q2)
    return out


def gsa_helper(k, q, params):
    """Convenience wrapper matching the PyTorch module's call signature."""
    m, d = k.shape
    prep = prepare_gsa_params(params, d, _round_up(d, 128))
    return _gsa_forward(k, q, prep, d=d)


def _reference(k, q, params):
    d = k.shape[1]
    k1 = k @ params["wk"].T + params["bk"]
    q1 = q @ params["wq"].T + params["bq"]
    kq = jax.nn.sigmoid((k1 * q1) @ params["wkq"].T + params["bkq"])
    k2 = k * kq
    q2 = q * kq
    s = (k2 @ q2.T) / math.sqrt(d)
    return jax.nn.softmax(s.reshape(-1)).reshape(k.shape[0], k.shape[0])


if __name__ == "__main__":
    m, d = 8, 32
    key = jax.random.PRNGKey(0)
    ks = jax.random.split(key, 8)

    bound = 1.0 / math.sqrt(d)
    params = {
        "wk":  jax.random.uniform(ks[0], (d, d), jnp.float32, -bound, bound),
        "bk":  jax.random.uniform(ks[1], (d,),   jnp.float32, -bound, bound),
        "wq":  jax.random.uniform(ks[2], (d, d), jnp.float32, -bound, bound),
        "bq":  jax.random.uniform(ks[3], (d,),   jnp.float32, -bound, bound),
        "wkq": jax.random.uniform(ks[4], (d, d), jnp.float32, -bound, bound),
        "bkq": jax.random.uniform(ks[5], (d,),   jnp.float32, -bound, bound),
    }
    k_in = jax.random.normal(ks[6], (m, d), jnp.float32)
    q_in = jax.random.normal(ks[7], (m, d), jnp.float32)

    # Parameter prep (transpose + pad) hoisted out of the per-call path.
    prep = prepare_gsa_params(params, d, _round_up(d, 128))

    out = _gsa_forward(k_in, q_in, prep, d=d)
    out = jax.block_until_ready(out)

    ref = _reference(k_in, q_in, params)
    assert out.shape == (m, m)
    assert jnp.allclose(out, ref, atol=1e-5, rtol=1e-5), "mismatch vs JAX reference"
    assert jnp.allclose(jnp.sum(out), 1.0, atol=1e-5), "flat softmax must sum to 1"

    print("KERNEL_OK")
</pallas_src>

<mosaic_0001>
module attributes {stable_mosaic.version = 11 : i64} {
  func.func @_gate_kernel(%arg0: i32, %arg1: memref<8x128xf32, #tpu.memory_space<vmem>>, %arg2: memref<8x128xf32, #tpu.memory_space<vmem>>, %arg3: memref<128x128xf32, #tpu.memory_space<vmem>>, %arg4: memref<1x128xf32, #tpu.memory_space<vmem>>, %arg5: memref<128x128xf32, #tpu.memory_space<vmem>>, %arg6: memref<1x128xf32, #tpu.memory_space<vmem>>, %arg7: memref<128x128xf32, #tpu.memory_space<vmem>>, %arg8: memref<1x128xf32, #tpu.memory_space<vmem>>, %arg9: memref<8x128xf32, #tpu.memory_space<vmem>>, %arg10: memref<8x128xf32, #tpu.memory_space<vmem>>) attributes {dimension_semantics = [#tpu.dimension_semantics<parallel>], iteration_bounds = array<i64: 1>, scalar_prefetch = 0 : i64, scratch_operands = 0 : i64, tpu.core_type = #tpu.core_type<tc>, window_params = [{transform_indices = @transform_0, window_bounds = array<i64: 8, 128>}, {transform_indices = @transform_1, window_bounds = array<i64: 8, 128>}, {pipeline_mode = #tpu.pipeline_mode<synchronous>, transform_indices = @transform_2, window_bounds = array<i64: 128, 128>}, {pipeline_mode = #tpu.pipeline_mode<synchronous>, transform_indices = @transform_3, window_bounds = array<i64: 1, 128>}, {pipeline_mode = #tpu.pipeline_mode<synchronous>, transform_indices = @transform_4, window_bounds = array<i64: 128, 128>}, {pipeline_mode = #tpu.pipeline_mode<synchronous>, transform_indices = @transform_5, window_bounds = array<i64: 1, 128>}, {pipeline_mode = #tpu.pipeline_mode<synchronous>, transform_indices = @transform_6, window_bounds = array<i64: 128, 128>}, {pipeline_mode = #tpu.pipeline_mode<synchronous>, transform_indices = @transform_7, window_bounds = array<i64: 1, 128>}, {transform_indices = @transform_8, window_bounds = array<i64: 8, 128>}, {transform_indices = @transform_9, window_bounds = array<i64: 8, 128>}]} {
    %c0 = arith.constant 0 : index
    %c0_0 = arith.constant 0 : index
    %0 = vector.load %arg1[%c0, %c0_0] : memref<8x128xf32, #tpu.memory_space<vmem>>, vector<8x128xf32>
    %c0_1 = arith.constant 0 : index
    %c0_2 = arith.constant 0 : index
    %1 = vector.load %arg2[%c0_1, %c0_2] : memref<8x128xf32, #tpu.memory_space<vmem>>, vector<8x128xf32>
    %c0_3 = arith.constant 0 : index
    %c0_4 = arith.constant 0 : index
    %2 = vector.load %arg3[%c0_3, %c0_4] : memref<128x128xf32, #tpu.memory_space<vmem>>, vector<128x128xf32>
    %cst = arith.constant dense<0.000000e+00> : vector<8x128xf32>
    %3 = tpu.matmul %0, %2, %cst {dimension_numbers = #tpu.dot_dimension_numbers<[1], [0], [0], [1], [0, 0, 1, 1], [], []>} : vector<8x128xf32>, vector<128x128xf32>, vector<8x128xf32> -> vector<8x128xf32>
    %c0_5 = arith.constant 0 : index
    %c0_6 = arith.constant 0 : index
    %4 = vector.load %arg4[%c0_5, %c0_6] : memref<1x128xf32, #tpu.memory_space<vmem>>, vector<1x128xf32>
    %5 = vector.broadcast %4 : vector<1x128xf32> to vector<8x128xf32>
    %6 = arith.addf %3, %5 : vector<8x128xf32>
    %c0_7 = arith.constant 0 : index
    %c0_8 = arith.constant 0 : index
    %7 = vector.load %arg5[%c0_7, %c0_8] : memref<128x128xf32, #tpu.memory_space<vmem>>, vector<128x128xf32>
    %cst_9 = arith.constant dense<0.000000e+00> : vector<8x128xf32>
    %8 = tpu.matmul %1, %7, %cst_9 {dimension_numbers = #tpu.dot_dimension_numbers<[1], [0], [0], [1], [0, 0, 1, 1], [], []>} : vector<8x128xf32>, vector<128x128xf32>, vector<8x128xf32> -> vector<8x128xf32>
    %c0_10 = arith.constant 0 : index
    %c0_11 = arith.constant 0 : index
    %9 = vector.load %arg6[%c0_10, %c0_11] : memref<1x128xf32, #tpu.memory_space<vmem>>, vector<1x128xf32>
    %10 = vector.broadcast %9 : vector<1x128xf32> to vector<8x128xf32>
    %11 = arith.addf %8, %10 : vector<8x128xf32>
    %12 = arith.mulf %6, %11 : vector<8x128xf32>
    %c0_12 = arith.constant 0 : index
    %c0_13 = arith.constant 0 : index
    %13 = vector.load %arg7[%c0_12, %c0_13] : memref<128x128xf32, #tpu.memory_space<vmem>>, vector<128x128xf32>
    %cst_14 = arith.constant dense<0.000000e+00> : vector<8x128xf32>
    %14 = tpu.matmul %12, %13, %cst_14 {dimension_numbers = #tpu.dot_dimension_numbers<[1], [0], [0], [1], [0, 0, 1, 1], [], []>} : vector<8x128xf32>, vector<128x128xf32>, vector<8x128xf32> -> vector<8x128xf32>
    %c0_15 = arith.constant 0 : index
    %c0_16 = arith.constant 0 : index
    %15 = vector.load %arg8[%c0_15, %c0_16] : memref<1x128xf32, #tpu.memory_space<vmem>>, vector<1x128xf32>
    %16 = vector.broadcast %15 : vector<1x128xf32> to vector<8x128xf32>
    %17 = arith.addf %14, %16 : vector<8x128xf32>
    %cst_17 = arith.constant 5.000000e-01 : f32
    %18 = vector.broadcast %cst_17 : f32 to vector<8x128xf32>
    %19 = arith.mulf %18, %17 : vector<8x128xf32>
    %20 = math.tanh %19 : vector<8x128xf32>
    %cst_18 = arith.constant 1.000000e+00 : f32
    %21 = vector.broadcast %cst_18 : f32 to vector<8x128xf32>
    %22 = arith.addf %20, %21 : vector<8x128xf32>
    %cst_19 = arith.constant 5.000000e-01 : f32
    %23 = vector.broadcast %cst_19 : f32 to vector<8x128xf32>
    %24 = arith.mulf %23, %22 : vector<8x128xf32>
    %25 = arith.mulf %0, %24 : vector<8x128xf32>
    %cst_20 = arith.constant 0.176776692 : f32
    %26 = vector.broadcast %cst_20 : f32 to vector<8x128xf32>
    %27 = arith.mulf %25, %26 : vector<8x128xf32>
    %c0_21 = arith.constant 0 : index
    %c0_22 = arith.constant 0 : index
    %28 = vector.load %arg9[%c0_21, %c0_22] : memref<8x128xf32, #tpu.memory_space<vmem>>, vector<8x128xf32>
    tpu.vector_store %arg9[%c0_21, %c0_22], %27 {strides = array<i32>} : memref<8x128xf32, #tpu.memory_space<vmem>>, vector<8x128xf32>,
    %29 = arith.mulf %1, %24 : vector<8x128xf32>
    %c0_23 = arith.constant 0 : index
    %c0_24 = arith.constant 0 : index
    %30 = vector.load %arg10[%c0_23, %c0_24] : memref<8x128xf32, #tpu.memory_space<vmem>>, vector<8x128xf32>
    tpu.vector_store %arg10[%c0_23, %c0_24], %29 {strides = array<i32>} : memref<8x128xf32, #tpu.memory_space<vmem>>, vector<8x128xf32>,
    return
  }
  func.func @transform_0(%arg0: i32) -> (i32, i32) {
    %c0_i32 = arith.constant 0 : i32
    %c0_i32_0 = arith.constant 0 : i32
    return %arg0, %c0_i32 : i32, i32
  }
  func.func @transform_1(%arg0: i32) -> (i32, i32) {
    %c0_i32 = arith.constant 0 : i32
    %c0_i32_0 = arith.constant 0 : i32
    return %arg0, %c0_i32 : i32, i32
  }
  func.func @transform_2(%arg0: i32) -> (i32, i32) {
    %c0_i32 = arith.constant 0 : i32
    %c0_i32_0 = arith.constant 0 : i32
    %c0_i32_1 = arith.constant 0 : i32
    return %c0_i32, %c0_i32_0 : i32, i32
  }
  func.func @transform_3(%arg0: i32) -> (i32, i32) {
    %c0_i32 = arith.constant 0 : i32
    %c0_i32_0 = arith.constant 0 : i32
    %c0_i32_1 = arith.constant 0 : i32
    return %c0_i32, %c0_i32_0 : i32, i32
  }
  func.func @transform_4(%arg0: i32) -> (i32, i32) {
    %c0_i32 = arith.constant 0 : i32
    %c0_i32_0 = arith.constant 0 : i32
    %c0_i32_1 = arith.constant 0 : i32
    return %c0_i32, %c0_i32_0 : i32, i32
  }
  func.func @transform_5(%arg0: i32) -> (i32, i32) {
    %c0_i32 = arith.constant 0 : i32
    %c0_i32_0 = arith.constant 0 : i32
    %c0_i32_1 = arith.constant 0 : i32
    return %c0_i32, %c0_i32_0 : i32, i32
  }
  func.func @transform_6(%arg0: i32) -> (i32, i32) {
    %c0_i32 = arith.constant 0 : i32
    %c0_i32_0 = arith.constant 0 : i32
    %c0_i32_1 = arith.constant 0 : i32
    return %c0_i32, %c0_i32_0 : i32, i32
  }
  func.func @transform_7(%arg0: i32) -> (i32, i32) {
    %c0_i32 = arith.constant 0 : i32
    %c0_i32_0 = arith.constant 0 : i32
    %c0_i32_1 = arith.constant 0 : i32
    return %c0_i32, %c0_i32_0 : i32, i32
  }
  func.func @transform_8(%arg0: i32) -> (i32, i32) {
    %c0_i32 = arith.constant 0 : i32
    %c0_i32_0 = arith.constant 0 : i32
    return %arg0, %c0_i32 : i32, i32
  }
  func.func @transform_9(%arg0: i32) -> (i32, i32) {
    %c0_i32 = arith.constant 0 : i32
    %c0_i32_0 = arith.constant 0 : i32
    return %arg0, %c0_i32 : i32, i32
  }
}

module attributes {stable_mosaic.version = 11 : i64} {
  func.func @_reduce_kernel(%arg0: i32, %arg1: i32, %arg2: memref<8x128xf32, #tpu.memory_space<vmem>>, %arg3: memref<8x128xf32, #tpu.memory_space<vmem>>, %arg4: memref<1x1x8xf32, #tpu.memory_space<vmem>>, %arg5: memref<1x1x8xf32, #tpu.memory_space<vmem>>, %arg6: memref<1x8xf32, #tpu.memory_space<vmem>>, %arg7: memref<1x8xf32, #tpu.memory_space<vmem>>) attributes {dimension_semantics = [#tpu.dimension_semantics<parallel>, #tpu.dimension_semantics<arbitrary>], iteration_bounds = array<i64: 1, 1>, scalar_prefetch = 0 : i64, scratch_operands = 2 : i64, tpu.core_type = #tpu.core_type<tc>, window_params = [{transform_indices = @transform_0, window_bounds = array<i64: 8, 128>}, {pipeline_mode = #tpu.pipeline_mode<synchronous>, transform_indices = @transform_1, window_bounds = array<i64: 8, 128>}, {transform_indices = @transform_2, window_bounds = array<i64: 1, 1, 8>}, {transform_indices = @transform_3, window_bounds = array<i64: 1, 1, 8>}]} {
    %c0_i32 = arith.constant 0 : i32
    %0 = arith.cmpi eq, %arg1, %c0_i32 : i32
    %1 = arith.extui %0 : i1 to i32
    %c0_i32_0 = arith.constant 0 : i32
    %2 = arith.cmpi ne, %1, %c0_i32_0 : i32
    scf.if %2 {
      %cst_17 = arith.constant 0xFF800000 : f32
      %29 = vector.broadcast %cst_17 : f32 to vector<1x8xf32>
      %c0_18 = arith.constant 0 : index
      %c0_19 = arith.constant 0 : index
      %30 = vector.load %arg6[%c0_18, %c0_19] : memref<1x8xf32, #tpu.memory_space<vmem>>, vector<1x8xf32>
      tpu.vector_store %arg6[%c0_18, %c0_19], %29 {strides = array<i32>} : memref<1x8xf32, #tpu.memory_space<vmem>>, vector<1x8xf32>,
      %cst_20 = arith.constant 0.000000e+00 : f32
      %31 = vector.broadcast %cst_20 : f32 to vector<1x8xf32>
      %c0_21 = arith.constant 0 : index
      %c0_22 = arith.constant 0 : index
      %32 = vector.load %arg7[%c0_21, %c0_22] : memref<1x8xf32, #tpu.memory_space<vmem>>, vector<1x8xf32>
      tpu.vector_store %arg7[%c0_21, %c0_22], %31 {strides = array<i32>} : memref<1x8xf32, #tpu.memory_space<vmem>>, vector<1x8xf32>,
    } else {
    }
    %c8_i32 = arith.constant 8 : i32
    %3 = arith.muli %arg1, %c8_i32 : i32
    %4 = tpu.assume_multiple %3, 8 : i32
    %5 = arith.index_cast %4 : i32 to index
    %c0 = arith.constant 0 : index
    %6 = vector.load %arg3[%5, %c0] : memref<8x128xf32, #tpu.memory_space<vmem>>, vector<8x128xf32>
    %c0_1 = arith.constant 0 : index
    %c0_2 = arith.constant 0 : index
    %7 = vector.load %arg2[%c0_1, %c0_2] : memref<8x128xf32, #tpu.memory_space<vmem>>, vector<8x128xf32>
    %cst = arith.constant dense<0.000000e+00> : vector<8x8xf32>
    %8 = tpu.matmul %7, %6, %cst {dimension_numbers = #tpu.dot_dimension_numbers<[1], [1], [0], [0], [0, 0, 1, 0], [], []>} : vector<8x128xf32>, vector<8x128xf32>, vector<8x8xf32> -> vector<8x8xf32>
    %cst_3 = arith.constant dense<0xFF800000> : vector<8xf32>
    %9 = vector.multi_reduction <maximumf>, %8, %cst_3 [0] : vector<8x8xf32> to vector<8xf32>
    %10 = vector.shape_cast %9 : vector<8xf32> to vector<1x8xf32>
    %c0_4 = arith.constant 0 : index
    %c0_5 = arith.constant 0 : index
    %11 = vector.load %arg6[%c0_4, %c0_5] : memref<1x8xf32, #tpu.memory_space<vmem>>, vector<1x8xf32>
    %12 = arith.maximumf %11, %10 : vector<1x8xf32>
    %c0_6 = arith.constant 0 : index
    %c0_7 = arith.constant 0 : index
    %13 = vector.load %arg7[%c0_6, %c0_7] : memref<1x8xf32, #tpu.memory_space<vmem>>, vector<1x8xf32>
    %c0_8 = arith.constant 0 : index
    %c0_9 = arith.constant 0 : index
    %14 = vector.load %arg6[%c0_8, %c0_9] : memref<1x8xf32, #tpu.memory_space<vmem>>, vector<1x8xf32>
    %15 = arith.subf %14, %12 : vector<1x8xf32>
    %16 = math.exp %15 : vector<1x8xf32>
    %17 = arith.mulf %13, %16 : vector<1x8xf32>
    %18 = vector.broadcast %12 : vector<1x8xf32> to vector<8x8xf32>
    %19 = arith.subf %8, %18 : vector<8x8xf32>
    %20 = math.exp %19 : vector<8x8xf32>
    %cst_10 = arith.constant dense<0.000000e+00> : vector<8xf32>
    %21 = vector.multi_reduction <add>, %20, %cst_10 [0] : vector<8x8xf32> to vector<8xf32>
    %22 = vector.shape_cast %21 : vector<8xf32> to vector<1x8xf32>
    %23 = arith.addf %17, %22 : vector<1x8xf32>
    %c0_11 = arith.constant 0 : index
    %c0_12 = arith.constant 0 : index
    %24 = vector.load %arg7[%c0_11, %c0_12] : memref<1x8xf32, #tpu.memory_space<vmem>>, vector<1x8xf32>
    tpu.vector_store %arg7[%c0_11, %c0_12], %23 {strides = array<i32>} : memref<1x8xf32, #tpu.memory_space<vmem>>, vector<1x8xf32>,
    %c0_13 = arith.constant 0 : index
    %c0_14 = arith.constant 0 : index
    %25 = vector.load %arg6[%c0_13, %c0_14] : memref<1x8xf32, #tpu.memory_space<vmem>>, vector<1x8xf32>
    tpu.vector_store %arg6[%c0_13, %c0_14], %12 {strides = array<i32>} : memref<1x8xf32, #tpu.memory_space<vmem>>, vector<1x8xf32>,
    %c0_i32_15 = arith.constant 0 : i32
    %26 = arith.cmpi eq, %arg1, %c0_i32_15 : i32
    %27 = arith.extui %26 : i1 to i32
    %c0_i32_16 = arith.constant 0 : i32
    %28 = arith.cmpi ne, %27, %c0_i32_16 : i32
    scf.if %28 {
      %c0_17 = arith.constant 0 : index
      %c0_18 = arith.constant 0 : index
      %29 = vector.load %arg6[%c0_17, %c0_18] : memref<1x8xf32, #tpu.memory_space<vmem>>, vector<1x8xf32>
      %c0_19 = arith.constant 0 : index
      %c0_20 = arith.constant 0 : index
      %c0_21 = arith.constant 0 : index
      %30 = vector.load %arg4[%c0_19, %c0_20, %c0_21] : memref<1x1x8xf32, #tpu.memory_space<vmem>>, vector<1x1x8xf32>
      %31 = vector.shape_cast %30 : vector<1x1x8xf32> to vector<1x8xf32>
      %32 = vector.shape_cast %29 : vector<1x8xf32> to vector<1x1x8xf32>
      tpu.vector_store %arg4[%c0_19, %c0_20, %c0_21], %32 {strides = array<i32>} : memref<1x1x8xf32, #tpu.memory_space<vmem>>, vector<1x1x8xf32>,
      %c0_22 = arith.constant 0 : index
      %c0_23 = arith.constant 0 : index
      %33 = vector.load %arg7[%c0_22, %c0_23] : memref<1x8xf32, #tpu.memory_space<vmem>>, vector<1x8xf32>
      %c0_24 = arith.constant 0 : index
      %c0_25 = arith.constant 0 : index
      %c0_26 = arith.constant 0 : index
      %34 = vector.load %arg5[%c0_24, %c0_25, %c0_26] : memref<1x1x8xf32, #tpu.memory_space<vmem>>, vector<1x1x8xf32>
      %35 = vector.shape_cast %34 : vector<1x1x8xf32> to vector<1x8xf32>
      %36 = vector.shape_cast %33 : vector<1x8xf32> to vector<1x1x8xf32>
      tpu.vector_store %arg5[%c0_24, %c0_25, %c0_26], %36 {strides = array<i32>} : memref<1x1x8xf32, #tpu.memory_space<vmem>>, vector<1x1x8xf32>,
    } else {
    }
    return
  }
  func.func @transform_0(%arg0: i32, %arg1: i32) -> (i32, i32) {
    %c0_i32 = arith.constant 0 : i32
    %c0_i32_0 = arith.constant 0 : i32
    return %arg0, %c0_i32 : i32, i32
  }
  func.func @transform_1(%arg0: i32, %arg1: i32) -> (i32, i32) {
    %c0_i32 = arith.constant 0 : i32
    %c0_i32_0 = arith.constant 0 : i32
    %c0_i32_1 = arith.constant 0 : i32
    return %c0_i32, %c0_i32_0 : i32, i32
  }
  func.func @transform_2(%arg0: i32, %arg1: i32) -> (i32, i32, i32) {
    %c0_i32 = arith.constant 0 : i32
    %c0_i32_0 = arith.constant 0 : i32
    %c0_i32_1 = arith.constant 0 : i32
    return %arg0, %c0_i32, %c0_i32_0 : i32, i32, i32
  }
  func.func @transform_3(%arg0: i32, %arg1: i32) -> (i32, i32, i32) {
    %c0_i32 = arith.constant 0 : i32
    %c0_i32_0 = arith.constant 0 : i32
    %c0_i32_1 = arith.constant 0 : i32
    return %arg0, %c0_i32, %c0_i32_0 : i32, i32, i32
  }
}

module attributes {stable_mosaic.version = 11 : i64} {
  func.func @_normalize_kernel(%arg0: i32, %arg1: i32, %arg2: memref<2xf32, #tpu.memory_space<smem>>, %arg3: memref<8x128xf32, #tpu.memory_space<vmem>>, %arg4: memref<8x128xf32, #tpu.memory_space<vmem>>, %arg5: memref<8x8xf32, #tpu.memory_space<vmem>>) attributes {dimension_semantics = [#tpu.dimension_semantics<parallel>, #tpu.dimension_semantics<parallel>], iteration_bounds = array<i64: 1, 1>, scalar_prefetch = 1 : i64, scratch_operands = 0 : i64, tpu.core_type = #tpu.core_type<tc>, window_params = [{transform_indices = @transform_0, window_bounds = array<i64: 8, 128>}, {pipeline_mode = #tpu.pipeline_mode<synchronous>, transform_indices = @transform_1, window_bounds = array<i64: 8, 128>}, {transform_indices = @transform_2, window_bounds = array<i64: 8, 8>}]} {
    %c8_i32 = arith.constant 8 : i32
    %0 = arith.muli %arg1, %c8_i32 : i32
    %1 = tpu.assume_multiple %0, 8 : i32
    %2 = arith.index_cast %1 : i32 to index
    %c0 = arith.constant 0 : index
    %3 = vector.load %arg4[%2, %c0] : memref<8x128xf32, #tpu.memory_space<vmem>>, vector<8x128xf32>
    %c0_0 = arith.constant 0 : index
    %c0_1 = arith.constant 0 : index
    %4 = vector.load %arg3[%c0_0, %c0_1] : memref<8x128xf32, #tpu.memory_space<vmem>>, vector<8x128xf32>
    %cst = arith.constant dense<0.000000e+00> : vector<8x8xf32>
    %5 = tpu.matmul %4, %3, %cst {dimension_numbers = #tpu.dot_dimension_numbers<[1], [1], [0], [0], [0, 0, 1, 0], [], []>} : vector<8x128xf32>, vector<8x128xf32>, vector<8x8xf32> -> vector<8x8xf32>
    %c0_2 = arith.constant 0 : index
    %6 = memref.load %arg2[%c0_2] : memref<2xf32, #tpu.memory_space<smem>>
    %7 = vector.broadcast %6 : f32 to vector<8x8xf32>
    %8 = arith.subf %5, %7 : vector<8x8xf32>
    %9 = math.exp %8 : vector<8x8xf32>
    %c1 = arith.constant 1 : index
    %10 = memref.load %arg2[%c1] : memref<2xf32, #tpu.memory_space<smem>>
    %11 = vector.broadcast %10 : f32 to vector<8x8xf32>
    %12 = arith.mulf %9, %11 : vector<8x8xf32>
    %c0_3 = arith.constant 0 : index
    %c0_4 = arith.constant 0 : index
    %13 = vector.load %arg5[%c0_3, %c0_4] : memref<8x8xf32, #tpu.memory_space<vmem>>, vector<8x8xf32>
    tpu.vector_store %arg5[%c0_3, %c0_4], %12 {strides = array<i32>} : memref<8x8xf32, #tpu.memory_space<vmem>>, vector<8x8xf32>,
    return
  }
  func.func @transform_0(%arg0: i32, %arg1: i32, %arg2: memref<2xf32, #tpu.memory_space<smem>>) -> (i32, i32) {
    %c0_i32 = arith.constant 0 : i32
    %c0_i32_0 = arith.constant 0 : i32
    return %arg0, %c0_i32 : i32, i32
  }
  func.func @transform_1(%arg0: i32, %arg1: i32, %arg2: memref<2xf32, #tpu.memory_space<smem>>) -> (i32, i32) {
    %c0_i32 = arith.constant 0 : i32
    %c0_i32_0 = arith.constant 0 : i32
    %c0_i32_1 = arith.constant 0 : i32
    return %c0_i32, %c0_i32_0 : i32, i32
  }
  func.func @transform_2(%arg0: i32, %arg1: i32, %arg2: memref<2xf32, #tpu.memory_space<smem>>) -> (i32, i32) {
    %c0_i32 = arith.constant 0 : i32
    return %arg0, %arg1 : i32, i32
  }
}

</mosaic_0001>

<llo_original>
// kernel: _gsa_forward.4
$region0: #{_gsa_forward.4}
  #allocation0 [shape = 'u32[]', space=smem, size = 0x4, offset = 0x4, fixed_abs, tag = 'smem constant byte address 0x4 - core index']
  #allocation1 [shape = 'u32[144,128]{1,0:T(1,128)}', space=vmem, size = 0x12000, scoped, tag = 'internal scratch']
  #allocation2 [shape = 'f32[1,8]{1,0:T(1,128)}', space=vmem, size = 0x200, scoped, tag = 'scratch operand']
  #allocation3 [shape = 'f32[1,8]{1,0:T(1,128)}', space=vmem, size = 0x200, scoped, tag = 'scratch operand']
  %s0 = inlined_call_operand.vmem [shape: f32[8,128], index: 0, kind: input, shape index: {}]
  %s1 = inlined_call_operand.vmem [shape: f32[8,128], index: 1, kind: input, shape index: {}]
  %s2 = inlined_call_operand.vmem [shape: f32[1,1,8], index: 2, kind: output, shape index: {0}]
  %s3 = inlined_call_operand.vmem [shape: f32[1,1,8], index: 3, kind: output, shape index: {1}]
  %4 = xla_tuple %s2, %s3
  %s5 = sld [smem:[#allocation0]]
  $region34: #{_gsa_forward.4} parent=0
    _
  %s7 = ssub.s32 1, %s5
  %s8 = scalar_select 0, %s7, %s5
  // Predicated region
  $region2: #{_gsa_forward.4} parent=0 // pred_check
    _
  $region3: #{_gsa_forward.4} parent=0 // pred_check_branch
    %10 = sbr.rel (0) target = $region5
  $region4: #{_gsa_forward.4} parent=0 // pred_region
    _
  $region5: #{_gsa_forward.4} parent=0 // pred_fallthru
    _
  // Predicated region
  $region6: #{_gsa_forward.4} parent=0 // pred_check
    _
  $region7: #{_gsa_forward.4} parent=0 // pred_check_branch
    %12 = sbr.rel (0) target = $region9
  $region8: #{_gsa_forward.4} parent=0 // pred_region
    _
  $region9: #{_gsa_forward.4} parent=0 // pred_fallthru
    _
  %p13 = scmp.eq.s32.totalorder 0, 0
  // Predicated region
  $region10: #{_gsa_forward.4} parent=0 // pred_check
    %p14 = pneg %p13
  $region11: #{_gsa_forward.4} parent=0 // pred_check_branch
    %16 = sbr.rel (%p14) target = $region13
  $region12: #{_gsa_forward.4} parent=0 // pred_region
    %vm17 = vcmask 57344
    %18 = vst.msk [vmem:[#allocation2] sm:$0x1] %vm17, -inf
    %19 = vst.msk [vmem:[#allocation3] sm:$0x1] %vm17, 0.0
  $region13: #{_gsa_forward.4} parent=0 // pred_fallthru
    _
  %s20 = smul.u32 0, 8
  %s21 = scalar_lea.vmem %s1, %s20
  %v22 = vld [vmem:[%s21] sm:$0xff]
  %v23 = vld [vmem:[%s0] sm:$0xff]
  %24 = vmatprep.subr.mxu0 0.0
  %25 = vmatpush1.xpose.msra.mxu0 0.0
  %26 = vmatprep.subr.mxu0 0.0
  %27 = vmatpush1.xpose.msra.mxu0 0.0
  %28 = vmatprep.subr.mxu0 0.0
  %29 = vmatpush1.xpose.msra.mxu0 0.0
  %30 = vmatprep.subr.mxu0 0.0
  %31 = vmatpush1.xpose.msra.mxu0 0.0
  %32 = vmatprep.subr.mxu0 0.0
  %33 = vmatpush1.xpose.msra.mxu0 0.0
  %34 = vmatprep.subr.mxu0 0.0
  %35 = vmatpush1.xpose.msra.mxu0 0.0
  %36 = vmatprep.subr.mxu0 0.0
  %37 = vmatpush1.xpose.msra.mxu0 0.0
  %38 = vmatprep.subr.mxu0 0.0
  %39 = vmatpush1.xpose.msra.mxu0 0.0
  %40 = vmatprep.subr.mxu0 0.0
  %41 = vmatpush1.xpose.msra.mxu0 0.0
  %42 = vmatprep.subr.mxu0 0.0
  %43 = vmatpush1.xpose.msra.mxu0 0.0
  %44 = vmatprep.subr.mxu0 0.0
  %45 = vmatpush1.xpose.msra.mxu0 0.0
  %46 = vmatprep.subr.mxu0 0.0
  %47 = vmatpush1.xpose.msra.mxu0 0.0
  %48 = vmatprep.subr.mxu0 0.0
  %49 = vmatpush1.xpose.msra.mxu0 0.0
  %50 = vmatprep.subr.mxu0 0.0
  %51 = vmatpush1.xpose.msra.mxu0 0.0
  %52 = vmatprep.subr.mxu0 0.0
  %53 = vmatpush1.xpose.msra.mxu0 0.0
  %54 = vmatprep.subr.mxu0 0.0
  %55 = vmatpush1.xpose.msra.mxu0 %v22
  %56 = vmatprep.subr.mxu0 0.0
  %57 = vmatpush2.xpose.msra.mxu0 0.0
  %58 = vmatprep.subr.mxu0 0.0
  %59 = vmatpush2.xpose.msra.mxu0 0.0
  %60 = vmatprep.subr.mxu0 0.0
  %61 = vmatpush2.xpose.msra.mxu0 0.0
  %62 = vmatprep.subr.mxu0 0.0
  %63 = vmatpush2.xpose.msra.mxu0 0.0
  %64 = vmatprep.subr.mxu0 0.0
  %65 = vmatpush2.xpose.msra.mxu0 0.0
  %66 = vmatprep.subr.mxu0 0.0
  %67 = vmatpush2.xpose.msra.mxu0 0.0
  %68 = vmatprep.subr.mxu0 0.0
  %69 = vmatpush2.xpose.msra.mxu0 0.0
  %70 = vmatprep.subr.mxu0 0.0
  %71 = vmatpush2.xpose.msra.mxu0 0.0
  %72 = vmatprep.subr.mxu0 0.0
  %73 = vmatpush2.xpose.msra.mxu0 0.0
  %74 = vmatprep.subr.mxu0 0.0
  %75 = vmatpush2.xpose.msra.mxu0 0.0
  %76 = vmatprep.subr.mxu0 0.0
  %77 = vmatpush2.xpose.msra.mxu0 0.0
  %78 = vmatprep.subr.mxu0 0.0
  %79 = vmatpush2.xpose.msra.mxu0 0.0
  %80 = vmatprep.subr.mxu0 0.0
  %81 = vmatpush2.xpose.msra.mxu0 0.0
  %82 = vmatprep.subr.mxu0 0.0
  %83 = vmatpush2.xpose.msra.mxu0 0.0
  %84 = vmatprep.subr.mxu0 0.0
  %85 = vmatpush2.xpose.msra.mxu0 0.0
  %86 = vmatprep.subr.mxu0 0.0
  %87 = vmatpush2.xpose.msra.mxu0 0.0
  %88 = vmatprep.mubr.f32.mxu0 0.0
  %89 = vmatmul.mubr.f32.gmra.mxu0 %v23
  %v90 = vpop.f32.mrf.mxu0
  %v91 = vadd.f32 0.0, %v90
  %v92 = vpop.f32.mrf.mxu0
  %93 = vdwg.mxu0
  %vm94 = vcmask 64512
  %v95 = vsel %vm94, %v91, -inf
  %v96 = vrot.slane %v95, 4
  %v97 = vmax.f32 %v95, %v96
  %v98 = vrot.slane %v97, 2
  %v99 = vmax.f32 %v97, %v98
  %v100 = vrot.slane %v99, 1
  %v101 = vmax.f32 %v99, %v100
  %v102 = vld [vmem:[#allocation2] sm:$0x1]
  %v103 = vmax.f32 %v102, %v101
  %v104 = vld [vmem:[#allocation3] sm:$0x1]
  %v105 = vsub.f32 %v102, %v103
  %v106 = vmul.f32 %v105, 1.442695
  %v107 = vpow.pop %v106
  %v108 = vmul.f32 %v104, %v107
  %v110 = vlaneseq
  %v111 = vshrl.u32 %v110, 7
  %v112 = vsub.s32 0, %v111
  %v113 = vrot.slane %v103, %v112
  %v115 = vsub.f32 %v91, %v113
  %v116 = vmul.f32 %v115, 1.442695
  %v117 = vpow.pop %v116
  %v118 = vsel %vm94, %v117, 0.0
  %v119 = vrot.slane %v118, 4
  %v120 = vadd.f32 %v118, %v119
  %v121 = vrot.slane %v120, 2
  %v122 = vadd.f32 %v120, %v121
  %v123 = vrot.slane %v122, 1
  %v124 = vadd.f32 %v122, %v123
  %v125 = vadd.f32 %v108, %v124
  %vm126 = vcmask 57344
  %127 = vst.msk [vmem:[#allocation3] sm:$0x1] %vm126, %v125
  %128 = vst.msk [vmem:[#allocation2] sm:$0x1] %vm126, %v103
  // Predicated region
  $region14: #{_gsa_forward.4} parent=0 // pred_check
    %p129 = pneg %p13
  $region15: #{_gsa_forward.4} parent=0 // pred_check_branch
    %131 = sbr.rel (%p129) target = $region17
  $region16: #{_gsa_forward.4} parent=0 // pred_region
    %v132 = vld [vmem:[#allocation2] sm:$0x1]
    %133 = vst.msk [vmem:[%s2] sm:$0x1] %vm126, %v132
    %v134 = vld [vmem:[#allocation3] sm:$0x1]
    %135 = vst.msk [vmem:[%s3] sm:$0x1] %vm126, %v134
  $region17: #{_gsa_forward.4} parent=0 // pred_fallthru
    _
  // Predicated region
  $region18: #{_gsa_forward.4} parent=0 // pred_check
    _
  $region19: #{_gsa_forward.4} parent=0 // pred_check_branch
    %137 = sbr.rel (0) target = $region21
  $region20: #{_gsa_forward.4} parent=0 // pred_region
    _
  $region21: #{_gsa_forward.4} parent=0 // pred_fallthru
    _
  // Predicated region
  $region22: #{_gsa_forward.4} parent=0 // pred_check
    _
  $region23: #{_gsa_forward.4} parent=0 // pred_check_branch
    %139 = sbr.rel (0) target = $region25
  $region24: #{_gsa_forward.4} parent=0 // pred_region
    _
  $region25: #{_gsa_forward.4} parent=0 // pred_fallthru
    _
  // Predicated region
  $region26: #{_gsa_forward.4} parent=0 // pred_check
    _
  $region27: #{_gsa_forward.4} parent=0 // pred_check_branch
    %141 = sbr.rel (0) target = $region29
  $region28: #{_gsa_forward.4} parent=0 // pred_region
    _
  $region29: #{_gsa_forward.4} parent=0 // pred_fallthru
    _
  // Predicated region
  $region30: #{_gsa_forward.4} parent=0 // pred_check
    _
  $region31: #{_gsa_forward.4} parent=0 // pred_check_branch
    %143 = sbr.rel (0) target = $region33
  $region32: #{_gsa_forward.4} parent=0 // pred_region
    _
  $region33: #{_gsa_forward.4} parent=0 // pred_fallthru
    _

// kernel: _gsa_forward.3
$region0: #{_gsa_forward.3}
  #allocation0 [shape = 'u32[]', space=smem, size = 0x4, offset = 0x4, fixed_abs, tag = 'smem constant byte address 0x4 - core index']
  #allocation1 [shape = 'u32[144,128]{1,0:T(1,128)}', space=vmem, size = 0x12000, scoped, tag = 'internal scratch']
  %s0 = inlined_call_operand.vmem [shape: f32[8,128], index: 0, kind: input, shape index: {}]
  %s1 = inlined_call_operand.vmem [shape: f32[8,128], index: 1, kind: input, shape index: {}]
  %s2 = inlined_call_operand.hbm [shape: f32[128,128], index: 2, kind: input, shape index: {}]
  %s3 = inlined_call_operand.vmem [shape: f32[1,128], index: 3, kind: input, shape index: {}]
  %s4 = inlined_call_operand.hbm [shape: f32[128,128], index: 4, kind: input, shape index: {}]
  %s5 = inlined_call_operand.vmem [shape: f32[1,128], index: 5, kind: input, shape index: {}]
  %s6 = inlined_call_operand.hbm [shape: f32[128,128], index: 6, kind: input, shape index: {}]
  %s7 = inlined_call_operand.vmem [shape: f32[1,128], index: 7, kind: input, shape index: {}]
  %s8 = inlined_call_operand.vmem [shape: f32[8,128], index: 8, kind: output, shape index: {0}]
  %s9 = inlined_call_operand.vmem [shape: f32[8,128], index: 9, kind: output, shape index: {1}]
  %10 = xla_tuple %s8, %s9
  %s11 = sld [smem:[#allocation0]]
  $region62: #{_gsa_forward.3} parent=0
    _
  %s13 = ssub.s32 1, %s11
  %s14 = scalar_select 0, %s13, %s11
  $region1: #{_gsa_forward.3} parent=0
    #allocation2 [shape = 'u8[65536]{0}', space=vmem, size = 0x10000, scoped, tag = 'input window, operand 2, single buffered']
    #allocation3 [shape = 's32[1]{0}', space=sflag, size = 0x4, scoped, tag = 'scoped memory for _gsa_forward.3']
    #allocation4 [shape = 'u8[65536]{0}', space=vmem, size = 0x10000, scoped, tag = 'input window, operand 4, single buffered']
    #allocation5 [shape = 's32[1]{0}', space=sflag, size = 0x4, scoped, tag = 'scoped memory for _gsa_forward.3']
    #allocation6 [shape = 'u8[65536]{0}', space=vmem, size = 0x10000, scoped, tag = 'input window, operand 6, single buffered']
    %15 = vsyncpa [#allocation3], 0
    %16 = vsyncpa [#allocation5], 0
    // Predicated region
    $region2: #{_gsa_forward.3} parent=1 // pred_check
      _
    $region3: #{_gsa_forward.3} parent=1 // pred_check_branch
      %18 = sbr.rel (0) target = $region5
    $region4: #{_gsa_forward.3} parent=1 // pred_region
      _
    $region5: #{_gsa_forward.3} parent=1 // pred_fallthru
      _
    // Predicated region
    $region6: #{_gsa_forward.3} parent=1 // pred_check
      _
    $region7: #{_gsa_forward.3} parent=1 // pred_check_branch
      %20 = sbr.rel (0) target = $region9
    $region8: #{_gsa_forward.3} parent=1 // pred_region
      _
    $region9: #{_gsa_forward.3} parent=1 // pred_fallthru
      _
    // Predicated region
    $region10: #{_gsa_forward.3} parent=1 // pred_check
      _
    $region11: #{_gsa_forward.3} parent=1 // pred_check_branch
      %22 = sbr.rel (0) target = $region13
    $region12: #{_gsa_forward.3} parent=1 // pred_region
      %s24 = ssub.s32 2048, 2048
      %25 = vsyncadd [#allocation3], %s24
      %s26 = sshll.u32 [#allocation2], 4
      %s27 = int_to_ptr.vmem [resolvable:$true] %s26
      %32 = dma.hbm_to_vmem [thread:$0]  %s2, 2048, %s27, [#allocation3], 128, 128, 8
    $region13: #{_gsa_forward.3} parent=1 // pred_fallthru
      _
    // Predicated region
    $region14: #{_gsa_forward.3} parent=1 // pred_check
      _
    $region15: #{_gsa_forward.3} parent=1 // pred_check_branch
      %34 = sbr.rel (0) target = $region17
    $region16: #{_gsa_forward.3} parent=1 // pred_region
      _
    $region17: #{_gsa_forward.3} parent=1 // pred_fallthru
      _
    // Predicated region
    $region18: #{_gsa_forward.3} parent=1 // pred_check
      _
    $region19: #{_gsa_forward.3} parent=1 // pred_check_branch
      %36 = sbr.rel (0) target = $region21
    $region20: #{_gsa_forward.3} parent=1 // pred_region
      %s38 = ssub.s32 2048, 2048
      %39 = vsyncadd [#allocation5], %s38
      %s40 = sshll.u32 [#allocation4], 4
      %s41 = int_to_ptr.vmem [resolvable:$true] %s40
      %46 = dma.hbm_to_vmem [thread:$0]  %s4, 2048, %s41, [#allocation5], 128, 128, 8
    $region21: #{_gsa_forward.3} parent=1 // pred_fallthru
      _
    // Predicated region
    $region22: #{_gsa_forward.3} parent=1 // pred_check
      _
    $region23: #{_gsa_forward.3} parent=1 // pred_check_branch
      %48 = sbr.rel (0) target = $region25
    $region24: #{_gsa_forward.3} parent=1 // pred_region
      _
    $region25: #{_gsa_forward.3} parent=1 // pred_fallthru
      _
    // Predicated region
    $region26: #{_gsa_forward.3} parent=1 // pred_check
      _
    $region27: #{_gsa_forward.3} parent=1 // pred_check_branch
      %50 = sbr.rel (0) target = $region29
    $region28: #{_gsa_forward.3} parent=1 // pred_region
      %s52 = ssub.s32 2048, 2048
      %53 = vsyncadd [#allocation5], %s52
      %s54 = sshll.u32 [#allocation6], 4
      %s55 = int_to_ptr.vmem [resolvable:$true] %s54
      %60 = dma.hbm_to_vmem [thread:$0]  %s6, 2048, %s55, [#allocation5], 128, 128, 8
    $region29: #{_gsa_forward.3} parent=1 // pred_fallthru
      _
    // Predicated region
    $region30: #{_gsa_forward.3} parent=1 // pred_check
      _
    $region31: #{_gsa_forward.3} parent=1 // pred_check_branch
      %62 = sbr.rel (0) target = $region33
    $region32: #{_gsa_forward.3} parent=1 // pred_region
      _
    $region33: #{_gsa_forward.3} parent=1 // pred_fallthru
      _
    // Predicated region
    $region34: #{_gsa_forward.3} parent=1 // pred_check
      _
    $region35: #{_gsa_forward.3} parent=1 // pred_check_branch
      %64 = sbr.rel (0) target = $region37
    $region36: #{_gsa_forward.3} parent=1 // pred_region
      %65 = dma.done [#allocation3], 2048
    $region37: #{_gsa_forward.3} parent=1 // pred_fallthru
      _
    // Predicated region
    $region38: #{_gsa_forward.3} parent=1 // pred_check
      _
    $region39: #{_gsa_forward.3} parent=1 // pred_check_branch
      %67 = sbr.rel (0) target = $region41
    $region40: #{_gsa_forward.3} parent=1 // pred_region
      %68 = dma.done [#allocation5], 2048
    $region41: #{_gsa_forward.3} parent=1 // pred_fallthru
      _
    // Predicated region
    $region42: #{_gsa_forward.3} parent=1 // pred_check
      _
    $region43: #{_gsa_forward.3} parent=1 // pred_check_branch
      %70 = sbr.rel (0) target = $region45
    $region44: #{_gsa_forward.3} parent=1 // pred_region
      %71 = dma.done [#allocation5], 2048
    $region45: #{_gsa_forward.3} parent=1 // pred_fallthru
      _
    %v72 = vld [vmem:[%s0] sm:$0xff]
    %v73 = vld [vmem:[%s1] sm:$0xff]
    %v74 = vld [vmem:[#allocation2] sm:$0xff]
    %v75 = vld [vmem:[#allocation2 + $0x8] sm:$0xff]
    %v76 = vld [vmem:[#allocation2 + $0x10] sm:$0xff]
    %v77 = vld [vmem:[#allocation2 + $0x18] sm:$0xff]
    %v78 = vld [vmem:[#allocation2 + $0x20] sm:$0xff]
    %v79 = vld [vmem:[#allocation2 + $0x28] sm:$0xff]
    %v80 = vld [vmem:[#allocation2 + $0x30] sm:$0xff]
    %v81 = vld [vmem:[#allocation2 + $0x38] sm:$0xff]
    %v82 = vld [vmem:[#allocation2 + $0x40] sm:$0xff]
    %v83 = vld [vmem:[#allocation2 + $0x48] sm:$0xff]
    %v84 = vld [vmem:[#allocation2 + $0x50] sm:$0xff]
    %v85 = vld [vmem:[#allocation2 + $0x58] sm:$0xff]
    %v86 = vld [vmem:[#allocation2 + $0x60] sm:$0xff]
    %v87 = vld [vmem:[#allocation2 + $0x68] sm:$0xff]
    %v88 = vld [vmem:[#allocation2 + $0x70] sm:$0xff]
    %v89 = vld [vmem:[#allocation2 + $0x78] sm:$0xff]
    %v90 = vld [vmem:[%s3] sm:$0x1]
    %v92 = vlaneseq
    %v93 = vshrl.u32 %v92, 7
    %v94 = vsub.s32 0, %v93
    %v95 = vrot.slane %v90, %v94
    %97 = vmatprep.subr.mxu0 0.0
    %98 = vmatpush1.msra.mxu0 %v89
    %99 = vmatprep.subr.mxu0 0.0
    %100 = vmatpush1.msra.mxu0 %v88
    %101 = vmatprep.subr.mxu0 0.0
    %102 = vmatpush1.msra.mxu0 %v87
    %103 = vmatprep.subr.mxu0 0.0
    %104 = vmatpush1.msra.mxu0 %v86
    %105 = vmatprep.subr.mxu0 0.0
    %106 = vmatpush1.msra.mxu0 %v85
    %107 = vmatprep.subr.mxu0 0.0
    %108 = vmatpush1.msra.mxu0 %v84
    %109 = vmatprep.subr.mxu0 0.0
    %110 = vmatpush1.msra.mxu0 %v83
    %111 = vmatprep.subr.mxu0 0.0
    %112 = vmatpush1.msra.mxu0 %v82
    %113 = vmatprep.subr.mxu0 0.0
    %114 = vmatpush1.msra.mxu0 %v81
    %115 = vmatprep.subr.mxu0 0.0
    %116 = vmatpush1.msra.mxu0 %v80
    %117 = vmatprep.subr.mxu0 0.0
    %118 = vmatpush1.msra.mxu0 %v79
    %119 = vmatprep.subr.mxu0 0.0
    %120 = vmatpush1.msra.mxu0 %v78
    %121 = vmatprep.subr.mxu0 0.0
    %122 = vmatpush1.msra.mxu0 %v77
    %123 = vmatprep.subr.mxu0 0.0
    %124 = vmatpush1.msra.mxu0 %v76
    %125 = vmatprep.subr.mxu0 0.0
    %126 = vmatpush1.msra.mxu0 %v75
    %127 = vmatprep.subr.mxu0 0.0
    %128 = vmatpush1.msra.mxu0 %v74
    %129 = vmatprep.subr.mxu0 0.0
    %130 = vmatpush2.msra.mxu0 0.0
    %131 = vmatprep.subr.mxu0 0.0
    %132 = vmatpush2.msra.mxu0 0.0
    %133 = vmatprep.subr.mxu0 0.0
    %134 = vmatpush2.msra.mxu0 0.0
    %135 = vmatprep.subr.mxu0 0.0
    %136 = vmatpush2.msra.mxu0 0.0
    %137 = vmatprep.subr.mxu0 0.0
    %138 = vmatpush2.msra.mxu0 0.0
    %139 = vmatprep.subr.mxu0 0.0
    %140 = vmatpush2.msra.mxu0 0.0
    %141 = vmatprep.subr.mxu0 0.0
    %142 = vmatpush2.msra.mxu0 0.0
    %143 = vmatprep.subr.mxu0 0.0
    %144 = vmatpush2.msra.mxu0 0.0
    %145 = vmatprep.subr.mxu0 0.0
    %146 = vmatpush2.msra.mxu0 0.0
    %147 = vmatprep.subr.mxu0 0.0
    %148 = vmatpush2.msra.mxu0 0.0
    %149 = vmatprep.subr.mxu0 0.0
    %150 = vmatpush2.msra.mxu0 0.0
    %151 = vmatprep.subr.mxu0 0.0
    %152 = vmatpush2.msra.mxu0 0.0
    %153 = vmatprep.subr.mxu0 0.0
    %154 = vmatpush2.msra.mxu0 0.0
    %155 = vmatprep.subr.mxu0 0.0
    %156 = vmatpush2.msra.mxu0 0.0
    %157 = vmatprep.subr.mxu0 0.0
    %158 = vmatpush2.msra.mxu0 0.0
    %159 = vmatprep.subr.mxu0 0.0
    %160 = vmatpush2.msra.mxu0 0.0
    %161 = vmatprep.mubr.f32.mxu0 0.0
    %162 = vmatmul.mubr.f32.gmra.mxu0 %v72
    %v163 = vpop.f32.mrf.mxu0
    %v164 = vadd.f32 %v95, %v163
    %v165 = vpop.f32.mrf.mxu0
    %166 = vdwg.mxu0
    %v167 = vld [vmem:[#allocation4] sm:$0xff]
    %v168 = vld [vmem:[#allocation4 + $0x8] sm:$0xff]
    %v169 = vld [vmem:[#allocation4 + $0x10] sm:$0xff]
    %v170 = vld [vmem:[#allocation4 + $0x18] sm:$0xff]
    %v171 = vld [vmem:[#allocation4 + $0x20] sm:$0xff]
    %v172 = vld [vmem:[#allocation4 + $0x28] sm:$0xff]
    %v173 = vld [vmem:[#allocation4 + $0x30] sm:$0xff]
    %v174 = vld [vmem:[#allocation4 + $0x38] sm:$0xff]
    %v175 = vld [vmem:[#allocation4 + $0x40] sm:$0xff]
    %v176 = vld [vmem:[#allocation4 + $0x48] sm:$0xff]
    %v177 = vld [vmem:[#allocation4 + $0x50] sm:$0xff]
    %v178 = vld [vmem:[#allocation4 + $0x58] sm:$0xff]
    %v179 = vld [vmem:[#allocation4 + $0x60] sm:$0xff]
    %v180 = vld [vmem:[#allocation4 + $0x68] sm:$0xff]
    %v181 = vld [vmem:[#allocation4 + $0x70] sm:$0xff]
    %v182 = vld [vmem:[#allocation4 + $0x78] sm:$0xff]
    %v183 = vld [vmem:[%s5] sm:$0x1]
    %v185 = vlaneseq
    %v186 = vshrl.u32 %v185, 7
    %v187 = vsub.s32 0, %v186
    %v188 = vrot.slane %v183, %v187
    %190 = vmatprep.subr.mxu0 0.0
    %191 = vmatpush1.msra.mxu0 %v182
    %192 = vmatprep.subr.mxu0 0.0
    %193 = vmatpush1.msra.mxu0 %v181
    %194 = vmatprep.subr.mxu0 0.0
    %195 = vmatpush1.msra.mxu0 %v180
    %196 = vmatprep.subr.mxu0 0.0
    %197 = vmatpush1.msra.mxu0 %v179
    %198 = vmatprep.subr.mxu0 0.0
    %199 = vmatpush1.msra.mxu0 %v178
    %200 = vmatprep.subr.mxu0 0.0
    %201 = vmatpush1.msra.mxu0 %v177
    %202 = vmatprep.subr.mxu0 0.0
    %203 = vmatpush1.msra.mxu0 %v176
    %204 = vmatprep.subr.mxu0 0.0
    %205 = vmatpush1.msra.mxu0 %v175
    %206 = vmatprep.subr.mxu0 0.0
    %207 = vmatpush1.msra.mxu0 %v174
    %208 = vmatprep.subr.mxu0 0.0
    %209 = vmatpush1.msra.mxu0 %v173
    %210 = vmatprep.subr.mxu0 0.0
    %211 = vmatpush1.msra.mxu0 %v172
    %212 = vmatprep.subr.mxu0 0.0
    %213 = vmatpush1.msra.mxu0 %v171
    %214 = vmatprep.subr.mxu0 0.0
    %215 = vmatpush1.msra.mxu0 %v170
    %216 = vmatprep.subr.mxu0 0.0
    %217 = vmatpush1.msra.mxu0 %v169
    %218 = vmatprep.subr.mxu0 0.0
    %219 = vmatpush1.msra.mxu0 %v168
    %220 = vmatprep.subr.mxu0 0.0
    %221 = vmatpush1.msra.mxu0 %v167
    %222 = vmatprep.subr.mxu0 0.0
    %223 = vmatpush2.msra.mxu0 0.0
    %224 = vmatprep.subr.mxu0 0.0
    %225 = vmatpush2.msra.mxu0 0.0
    %226 = vmatprep.subr.mxu0 0.0
    %227 = vmatpush2.msra.mxu0 0.0
    %228 = vmatprep.subr.mxu0 0.0
    %229 = vmatpush2.msra.mxu0 0.0
    %230 = vmatprep.subr.mxu0 0.0
    %231 = vmatpush2.msra.mxu0 0.0
    %232 = vmatprep.subr.mxu0 0.0
    %233 = vmatpush2.msra.mxu0 0.0
    %234 = vmatprep.subr.mxu0 0.0
    %235 = vmatpush2.msra.mxu0 0.0
    %236 = vmatprep.subr.mxu0 0.0
    %237 = vmatpush2.msra.mxu0 0.0
    %238 = vmatprep.subr.mxu0 0.0
    %239 = vmatpush2.msra.mxu0 0.0
    %240 = vmatprep.subr.mxu0 0.0
    %241 = vmatpush2.msra.mxu0 0.0
    %242 = vmatprep.subr.mxu0 0.0
    %243 = vmatpush2.msra.mxu0 0.0
    %244 = vmatprep.subr.mxu0 0.0
    %245 = vmatpush2.msra.mxu0 0.0
    %246 = vmatprep.subr.mxu0 0.0
    %247 = vmatpush2.msra.mxu0 0.0
    %248 = vmatprep.subr.mxu0 0.0
    %249 = vmatpush2.msra.mxu0 0.0
    %250 = vmatprep.subr.mxu0 0.0
    %251 = vmatpush2.msra.mxu0 0.0
    %252 = vmatprep.subr.mxu0 0.0
    %253 = vmatpush2.msra.mxu0 0.0
    %254 = vmatprep.mubr.f32.mxu0 0.0
    %255 = vmatmul.mubr.f32.gmra.mxu0 %v73
    %v256 = vpop.f32.mrf.mxu0
    %v257 = vadd.f32 %v188, %v256
    %v258 = vpop.f32.mrf.mxu0
    %259 = vdwg.mxu0
    %v260 = vmul.f32 %v164, %v257
    %v261 = vld [vmem:[#allocation6] sm:$0xff]
    %v262 = vld [vmem:[#allocation6 + $0x8] sm:$0xff]
    %v263 = vld [vmem:[#allocation6 + $0x10] sm:$0xff]
    %v264 = vld [vmem:[#allocation6 + $0x18] sm:$0xff]
    %v265 = vld [vmem:[#allocation6 + $0x20] sm:$0xff]
    %v266 = vld [vmem:[#allocation6 + $0x28] sm:$0xff]
    %v267 = vld [vmem:[#allocation6 + $0x30] sm:$0xff]
    %v268 = vld [vmem:[#allocation6 + $0x38] sm:$0xff]
    %v269 = vld [vmem:[#allocation6 + $0x40] sm:$0xff]
    %v270 = vld [vmem:[#allocation6 + $0x48] sm:$0xff]
    %v271 = vld [vmem:[#allocation6 + $0x50] sm:$0xff]
    %v272 = vld [vmem:[#allocation6 + $0x58] sm:$0xff]
    %v273 = vld [vmem:[#allocation6 + $0x60] sm:$0xff]
    %v274 = vld [vmem:[#allocation6 + $0x68] sm:$0xff]
    %v275 = vld [vmem:[#allocation6 + $0x70] sm:$0xff]
    %v276 = vld [vmem:[#allocation6 + $0x78] sm:$0xff]
    %v277 = vld [vmem:[%s7] sm:$0x1]
    %v279 = vlaneseq
    %v280 = vshrl.u32 %v279, 7
    %v281 = vsub.s32 0, %v280
    %v282 = vrot.slane %v277, %v281
    %284 = vmatprep.subr.mxu0 0.0
    %285 = vmatpush1.msra.mxu0 %v276
    %286 = vmatprep.subr.mxu0 0.0
    %287 = vmatpush1.msra.mxu0 %v275
    %288 = vmatprep.subr.mxu0 0.0
    %289 = vmatpush1.msra.mxu0 %v274
    %290 = vmatprep.subr.mxu0 0.0
    %291 = vmatpush1.msra.mxu0 %v273
    %292 = vmatprep.subr.mxu0 0.0
    %293 = vmatpush1.msra.mxu0 %v272
    %294 = vmatprep.subr.mxu0 0.0
    %295 = vmatpush1.msra.mxu0 %v271
    %296 = vmatprep.subr.mxu0 0.0
    %297 = vmatpush1.msra.mxu0 %v270
    %298 = vmatprep.subr.mxu0 0.0
    %299 = vmatpush1.msra.mxu0 %v269
    %300 = vmatprep.subr.mxu0 0.0
    %301 = vmatpush1.msra.mxu0 %v268
    %302 = vmatprep.subr.mxu0 0.0
    %303 = vmatpush1.msra.mxu0 %v267
    %304 = vmatprep.subr.mxu0 0.0
    %305 = vmatpush1.msra.mxu0 %v266
    %306 = vmatprep.subr.mxu0 0.0
    %307 = vmatpush1.msra.mxu0 %v265
    %308 = vmatprep.subr.mxu0 0.0
    %309 = vmatpush1.msra.mxu0 %v264
    %310 = vmatprep.subr.mxu0 0.0
    %311 = vmatpush1.msra.mxu0 %v263
    %312 = vmatprep.subr.mxu0 0.0
    %313 = vmatpush1.msra.mxu0 %v262
    %314 = vmatprep.subr.mxu0 0.0
    %315 = vmatpush1.msra.mxu0 %v261
    %316 = vmatprep.subr.mxu0 0.0
    %317 = vmatpush2.msra.mxu0 0.0
    %318 = vmatprep.subr.mxu0 0.0
    %319 = vmatpush2.msra.mxu0 0.0
    %320 = vmatprep.subr.mxu0 0.0
    %321 = vmatpush2.msra.mxu0 0.0
    %322 = vmatprep.subr.mxu0 0.0
    %323 = vmatpush2.msra.mxu0 0.0
    %324 = vmatprep.subr.mxu0 0.0
    %325 = vmatpush2.msra.mxu0 0.0
    %326 = vmatprep.subr.mxu0 0.0
    %327 = vmatpush2.msra.mxu0 0.0
    %328 = vmatprep.subr.mxu0 0.0
    %329 = vmatpush2.msra.mxu0 0.0
    %330 = vmatprep.subr.mxu0 0.0
    %331 = vmatpush2.msra.mxu0 0.0
    %332 = vmatprep.subr.mxu0 0.0
    %333 = vmatpush2.msra.mxu0 0.0
    %334 = vmatprep.subr.mxu0 0.0
    %335 = vmatpush2.msra.mxu0 0.0
    %336 = vmatprep.subr.mxu0 0.0
    %337 = vmatpush2.msra.mxu0 0.0
    %338 = vmatprep.subr.mxu0 0.0
    %339 = vmatpush2.msra.mxu0 0.0
    %340 = vmatprep.subr.mxu0 0.0
    %341 = vmatpush2.msra.mxu0 0.0
    %342 = vmatprep.subr.mxu0 0.0
    %343 = vmatpush2.msra.mxu0 0.0
    %344 = vmatprep.subr.mxu0 0.0
    %345 = vmatpush2.msra.mxu0 0.0
    %346 = vmatprep.subr.mxu0 0.0
    %347 = vmatpush2.msra.mxu0 0.0
    %348 = vmatprep.mubr.f32.mxu0 0.0
    %349 = vmatmul.mubr.f32.gmra.mxu0 %v260
    %v350 = vpop.f32.mrf.mxu0
    %v351 = vadd.f32 %v282, %v350
    %v352 = vpop.f32.mrf.mxu0
    %353 = vdwg.mxu0
    %v354 = vmul.f32 %v351, 0.5
    %v355 = vtanh.pop %v354
    %v356 = vadd.f32 %v355, 1.0
    %v357 = vmul.f32 %v356, 0.5
    %v358 = vmul.f32 %v72, %v357
    %v359 = vmul.f32 %v358, 0.17677669
    %360 = vst [vmem:[%s8] sm:$0xff] %v359
    %v361 = vmul.f32 %v73, %v357
    %362 = vst [vmem:[%s9] sm:$0xff] %v361
    // Predicated region
    $region46: #{_gsa_forward.3} parent=1 // pred_check
      _
    $region47: #{_gsa_forward.3} parent=1 // pred_check_branch
      %364 = sbr.rel (0) target = $region49
    $region48: #{_gsa_forward.3} parent=1 // pred_region
      _
    $region49: #{_gsa_forward.3} parent=1 // pred_fallthru
      _
    // Predicated region
    $region50: #{_gsa_forward.3} parent=1 // pred_check
      _
    $region51: #{_gsa_forward.3} parent=1 // pred_check_branch
      %366 = sbr.rel (0) target = $region53
    $region52: #{_gsa_forward.3} parent=1 // pred_region
      _
    $region53: #{_gsa_forward.3} parent=1 // pred_fallthru
      _
    // Predicated region
    $region54: #{_gsa_forward.3} parent=1 // pred_check
      _
    $region55: #{_gsa_forward.3} parent=1 // pred_check_branch
      %368 = sbr.rel (0) target = $region57
    $region56: #{_gsa_forward.3} parent=1 // pred_region
      _
    $region57: #{_gsa_forward.3} parent=1 // pred_fallthru
      _
    // Predicated region
    $region58: #{_gsa_forward.3} parent=1 // pred_check
      _
    $region59: #{_gsa_forward.3} parent=1 // pred_check_branch
      %370 = sbr.rel (0) target = $region61
    $region60: #{_gsa_forward.3} parent=1 // pred_region
      _
    $region61: #{_gsa_forward.3} parent=1 // pred_fallthru
      _
    %371 = vsyncpa [#allocation3], 1
    %372 = vsyncpa [#allocation5], 1

// kernel: _gsa_forward.5
$region0: #{_gsa_forward.5}
  #allocation0 [shape = 'u32[]', space=smem, size = 0x4, offset = 0x4, fixed_abs, tag = 'smem constant byte address 0x4 - core index']
  #allocation1 [shape = 'u32[144,128]{1,0:T(1,128)}', space=vmem, size = 0x12000, scoped, tag = 'internal scratch']
  #allocation2 [shape = 's32[1]{0}', space=sflag, size = 0x4, scoped, tag = 'scoped memory for _gsa_forward.5']
  #allocation3 [shape = 'u8[512]{0}', space=smem, size = 0x200, scoped, tag = 'prefetched SMEM operand 0']
  %s0 = inlined_call_operand.vmem [shape: f32[2], index: 0, kind: input, shape index: {}]
  %s1 = inlined_call_operand.vmem [shape: f32[8,128], index: 1, kind: input, shape index: {}]
  %s2 = inlined_call_operand.vmem [shape: f32[8,128], index: 2, kind: input, shape index: {}]
  %s3 = inlined_call_operand.hbm [shape: f32[8,8], index: 3, kind: output, shape index: {}]
  %s4 = sld [smem:[#allocation0]]
  $region18: #{_gsa_forward.5} parent=0
    _
  %s6 = ssub.s32 1, %s4
  %s7 = scalar_select 0, %s6, %s4
  %s8 = sshll.u32 %s0, 4
  %s9 = int_to_ptr.vmem [resolvable:$true] %s8
  %11 = dma.vmem_to_smem %s9, 16, [#allocation3], [#allocation2]
  %12 = dma.done [#allocation2], 16
  %13 = sfence
  $region1: #{_gsa_forward.5} parent=0
    #allocation4 [shape = 'u8[4096]{0}', space=vmem, size = 0x1000, scoped, tag = 'output window, operand 0, single buffered']
    #allocation5 [shape = 's32[1]{0}', space=sflag, size = 0x4, scoped, tag = 'scoped memory for _gsa_forward.5']
    %14 = vsyncpa [#allocation5], 0
    // Predicated region
    $region2: #{_gsa_forward.5} parent=1 // pred_check
      _
    $region3: #{_gsa_forward.5} parent=1 // pred_check_branch
      %16 = sbr.rel (0) target = $region5
    $region4: #{_gsa_forward.5} parent=1 // pred_region
      _
    $region5: #{_gsa_forward.5} parent=1 // pred_fallthru
      _
    // Predicated region
    $region6: #{_gsa_forward.5} parent=1 // pred_check
      _
    $region7: #{_gsa_forward.5} parent=1 // pred_check_branch
      %18 = sbr.rel (0) target = $region9
    $region8: #{_gsa_forward.5} parent=1 // pred_region
      _
    $region9: #{_gsa_forward.5} parent=1 // pred_fallthru
      _
    %s19 = smul.u32 0, 8
    %s20 = scalar_lea.vmem %s2, %s19
    %v21 = vld [vmem:[%s20] sm:$0xff]
    %v22 = vld [vmem:[%s1] sm:$0xff]
    %23 = vmatprep.subr.mxu0 0.0
    %24 = vmatpush1.xpose.msra.mxu0 0.0
    %25 = vmatprep.subr.mxu0 0.0
    %26 = vmatpush1.xpose.msra.mxu0 0.0
    %27 = vmatprep.subr.mxu0 0.0
    %28 = vmatpush1.xpose.msra.mxu0 0.0
    %29 = vmatprep.subr.mxu0 0.0
    %30 = vmatpush1.xpose.msra.mxu0 0.0
    %31 = vmatprep.subr.mxu0 0.0
    %32 = vmatpush1.xpose.msra.mxu0 0.0
    %33 = vmatprep.subr.mxu0 0.0
    %34 = vmatpush1.xpose.msra.mxu0 0.0
    %35 = vmatprep.subr.mxu0 0.0
    %36 = vmatpush1.xpose.msra.mxu0 0.0
    %37 = vmatprep.subr.mxu0 0.0
    %38 = vmatpush1.xpose.msra.mxu0 0.0
    %39 = vmatprep.subr.mxu0 0.0
    %40 = vmatpush1.xpose.msra.mxu0 0.0
    %41 = vmatprep.subr.mxu0 0.0
    %42 = vmatpush1.xpose.msra.mxu0 0.0
    %43 = vmatprep.subr.mxu0 0.0
    %44 = vmatpush1.xpose.msra.mxu0 0.0
    %45 = vmatprep.subr.mxu0 0.0
    %46 = vmatpush1.xpose.msra.mxu0 0.0
    %47 = vmatprep.subr.mxu0 0.0
    %48 = vmatpush1.xpose.msra.mxu0 0.0
    %49 = vmatprep.subr.mxu0 0.0
    %50 = vmatpush1.xpose.msra.mxu0 0.0
    %51 = vmatprep.subr.mxu0 0.0
    %52 = vmatpush1.xpose.msra.mxu0 0.0
    %53 = vmatprep.subr.mxu0 0.0
    %54 = vmatpush1.xpose.msra.mxu0 %v21
    %55 = vmatprep.subr.mxu0 0.0
    %56 = vmatpush2.xpose.msra.mxu0 0.0
    %57 = vmatprep.subr.mxu0 0.0
    %58 = vmatpush2.xpose.msra.mxu0 0.0
    %59 = vmatprep.subr.mxu0 0.0
    %60 = vmatpush2.xpose.msra.mxu0 0.0
    %61 = vmatprep.subr.mxu0 0.0
    %62 = vmatpush2.xpose.msra.mxu0 0.0
    %63 = vmatprep.subr.mxu0 0.0
    %64 = vmatpush2.xpose.msra.mxu0 0.0
    %65 = vmatprep.subr.mxu0 0.0
    %66 = vmatpush2.xpose.msra.mxu0 0.0
    %67 = vmatprep.subr.mxu0 0.0
    %68 = vmatpush2.xpose.msra.mxu0 0.0
    %69 = vmatprep.subr.mxu0 0.0
    %70 = vmatpush2.xpose.msra.mxu0 0.0
    %71 = vmatprep.subr.mxu0 0.0
    %72 = vmatpush2.xpose.msra.mxu0 0.0
    %73 = vmatprep.subr.mxu0 0.0
    %74 = vmatpush2.xpose.msra.mxu0 0.0
    %75 = vmatprep.subr.mxu0 0.0
    %76 = vmatpush2.xpose.msra.mxu0 0.0
    %77 = vmatprep.subr.mxu0 0.0
    %78 = vmatpush2.xpose.msra.mxu0 0.0
    %79 = vmatprep.subr.mxu0 0.0
    %80 = vmatpush2.xpose.msra.mxu0 0.0
    %81 = vmatprep.subr.mxu0 0.0
    %82 = vmatpush2.xpose.msra.mxu0 0.0
    %83 = vmatprep.subr.mxu0 0.0
    %84 = vmatpush2.xpose.msra.mxu0 0.0
    %85 = vmatprep.subr.mxu0 0.0
    %86 = vmatpush2.xpose.msra.mxu0 0.0
    %87 = vmatprep.mubr.f32.mxu0 0.0
    %88 = vmatmul.mubr.f32.gmra.mxu0 %v22
    %v89 = vpop.f32.mrf.mxu0
    %v90 = vadd.f32 0.0, %v89
    %v91 = vpop.f32.mrf.mxu0
    %92 = vdwg.mxu0
    %s93 = sld [smem:[#allocation3]]
    %v94 = vstv %s93
    %v95 = vsub.f32 %v90, %v94
    %v96 = vmul.f32 %v95, 1.442695
    %v97 = vpow.pop %v96
    %s98 = sld [smem:[#allocation3 + $0x1]]
    %v99 = vstv %s98
    %v100 = vmul.f32 %v97, %v99
    %vm101 = vcmask 64512
    %102 = vst.msk [vmem:[#allocation4] sm:$0xff] %vm101, %v100
    // Predicated region
    $region10: #{_gsa_forward.5} parent=1 // pred_check
      _
    $region11: #{_gsa_forward.5} parent=1 // pred_check_branch
      %104 = sbr.rel (0) target = $region13
    $region12: #{_gsa_forward.5} parent=1 // pred_region
      %s106 = ssub.s32 128, 128
      %107 = vsyncadd [#allocation5], %s106
      %s109 = sshll.u32 [#allocation4], 4
      %s110 = int_to_ptr.vmem [resolvable:$true] %s109
      %112 = dma.vmem_to_hbm [thread:$0]  %s110, 128, %s3, [#allocation5]
    $region13: #{_gsa_forward.5} parent=1 // pred_fallthru
      _
    // Predicated region
    $region14: #{_gsa_forward.5} parent=1 // pred_check
      _
    $region15: #{_gsa_forward.5} parent=1 // pred_check_branch
      %114 = sbr.rel (0) target = $region17
    $region16: #{_gsa_forward.5} parent=1 // pred_region
      %115 = dma.done [#allocation5], 128
    $region17: #{_gsa_forward.5} parent=1 // pred_fallthru
      _
    %116 = vsyncpa [#allocation5], 1

</llo_original>
